<compile_context>
chip_gen: v7x
topology: tpu7x:2x2x1
jax: 0.10.0
libtpu: 0.0.40
codegen_flags: <defaults>
</compile_context>

<pallas_src>
import jax
import jax.numpy as jnp
import numpy as np
from jax.experimental import pallas as pl
from jax.experimental.pallas import tpu as pltpu  # noqa: F401  (kept for clarity / future tuning)


def _input_selection_kernel(x1_ref, x2_ref, w_ref, b_ref, o_ref):
    """Fused gate/trans/mix.

    x1_ref: [B, F1]          (reliable features; also the residual path)
    x2_ref: [B, F2]
    w_ref : [F1+F2, 2*O]     columns [0:O] = gate weights, [O:2O] = trans weights
    b_ref : [1, 2*O]         packed biases (gate | trans)
    o_ref : [B, O]
    """
    out_f = o_ref.shape[-1]
    x1 = x1_ref[...]
    xcat = jnp.concatenate([x1, x2_ref[...]], axis=-1)              # [B, F1+F2]
    # Both Linear layers as a single MXU matmul.
    z = jnp.dot(xcat, w_ref[...], preferred_element_type=jnp.float32)
    z = z + b_ref[...]                                              # [B, 2*O]
    gate = jax.nn.sigmoid(z[:, :out_f])                             # EUP work
    trans = jnp.maximum(z[:, out_f:], 0.0)                          # VPU work
    o_ref[...] = (trans * gate + (1.0 - gate) * x1).astype(o_ref.dtype)


@jax.jit
def input_selection(inputs_1, inputs_2, wg, bg, wt, bt):
    """inputs_1: [..., F1], inputs_2: [..., F2]
    wg, wt: [F1+F2, O] (already input-major, i.e. PyTorch weight.T); bg, bt: [O]
    Returns [..., O] matching the PyTorch module (requires O == F1 for the residual mix)."""
    lead = inputs_1.shape[:-1]
    f1 = inputs_1.shape[-1]
    f2 = inputs_2.shape[-1]
    out_f = wg.shape[-1]
    assert f1 == out_f, "gated residual requires out_features == in_features_1"

    x1 = inputs_1.reshape(-1, f1)
    x2 = inputs_2.reshape(-1, f2)
    b = x1.shape[0]

    w_packed = jnp.concatenate([wg, wt], axis=-1)            # [F1+F2, 2*O]
    b_packed = jnp.concatenate([bg, bt], axis=-1)[None, :]   # [1, 2*O]

    out = pl.pallas_call(
        _input_selection_kernel,
        out_shape=jax.ShapeDtypeStruct((b, out_f), jnp.float32),
        grid=(1,),  # single step: whole problem (<< VMEM on all generations) in one invocation
        in_specs=[
            pl.BlockSpec((b, f1), lambda i: (0, 0)),
            pl.BlockSpec((b, f2), lambda i: (0, 0)),
            pl.BlockSpec((f1 + f2, 2 * out_f), lambda i: (0, 0)),
            pl.BlockSpec((1, 2 * out_f), lambda i: (0, 0)),
        ],
        out_specs=pl.BlockSpec((b, out_f), lambda i: (0, 0)),
    )(x1, x2, w_packed, b_packed)

    return out.reshape(*lead, out_f)


def _reference(inputs_1, inputs_2, wg, bg, wt, bt):
    """Pure-JAX reference of the PyTorch forward, for verification."""
    xcat = jnp.concatenate([inputs_1, inputs_2], axis=-1)
    gate = jax.nn.sigmoid(xcat @ wg + bg)
    trans = jnp.maximum(xcat @ wt + bt, 0.0)
    return trans * gate + (1.0 - gate) * inputs_1


if __name__ == "__main__":
    key = jax.random.PRNGKey(0)
    in_features_1 = 32   # reliable features (also the residual path width)
    in_features_2 = 32   # review-derived features
    out_features = 32    # must equal in_features_1 for the gated residual
    B = 6

    ks = jax.random.split(key, 6)
    x1 = jax.random.normal(ks[0], (B, in_features_1), jnp.float32)
    x2 = jax.random.normal(ks[1], (B, in_features_2), jnp.float32)

    # PyTorch-style Linear init, stored input-major [F1+F2, O] (== weight.T).
    fan_in = in_features_1 + in_features_2
    bound = 1.0 / np.sqrt(fan_in)
    wg = jax.random.uniform(ks[2], (fan_in, out_features), jnp.float32, -bound, bound)
    bg = jax.random.uniform(ks[3], (out_features,), jnp.float32, -bound, bound)
    wt = jax.random.uniform(ks[4], (fan_in, out_features), jnp.float32, -bound, bound)
    bt = jax.random.uniform(ks[5], (out_features,), jnp.float32, -bound, bound)

    out = input_selection(x1, x2, wg, bg, wt, bt)
    jax.block_until_ready(out)

    ref = _reference(x1, x2, wg, bg, wt, bt)
    assert out.shape == (B, out_features)
    np.testing.assert_allclose(np.asarray(out), np.asarray(ref), rtol=1e-5, atol=1e-5)

    print("KERNEL_OK")
</pallas_src>

<mosaic_0001>
module attributes {stable_mosaic.version = 11 : i64} {
  func.func @_input_selection_kernel(%arg0: i32, %arg1: memref<6x32xf32, #tpu.memory_space<vmem>>, %arg2: memref<6x32xf32, #tpu.memory_space<vmem>>, %arg3: memref<64x64xf32, #tpu.memory_space<vmem>>, %arg4: memref<1x64xf32, #tpu.memory_space<vmem>>, %arg5: memref<6x32xf32, #tpu.memory_space<vmem>>) attributes {dimension_semantics = [#tpu.dimension_semantics<arbitrary>], iteration_bounds = array<i64: 1>, scalar_prefetch = 0 : i64, scratch_operands = 0 : i64, tpu.core_type = #tpu.core_type<tc>, window_params = [{pipeline_mode = #tpu.pipeline_mode<synchronous>, transform_indices = @transform_0, window_bounds = array<i64: 6, 32>}, {pipeline_mode = #tpu.pipeline_mode<synchronous>, transform_indices = @transform_1, window_bounds = array<i64: 6, 32>}, {pipeline_mode = #tpu.pipeline_mode<synchronous>, transform_indices = @transform_2, window_bounds = array<i64: 64, 64>}, {pipeline_mode = #tpu.pipeline_mode<synchronous>, transform_indices = @transform_3, window_bounds = array<i64: 1, 64>}, {pipeline_mode = #tpu.pipeline_mode<synchronous>, transform_indices = @transform_4, window_bounds = array<i64: 6, 32>}]} {
    %c0 = arith.constant 0 : index
    %c0_0 = arith.constant 0 : index
    %0 = vector.load %arg1[%c0, %c0_0] : memref<6x32xf32, #tpu.memory_space<vmem>>, vector<6x32xf32>
    %c0_1 = arith.constant 0 : index
    %c0_2 = arith.constant 0 : index
    %1 = vector.load %arg2[%c0_1, %c0_2] : memref<6x32xf32, #tpu.memory_space<vmem>>, vector<6x32xf32>
    %2 = tpu.concatenate %0, %1 in 1 : vector<6x32xf32>, vector<6x32xf32> -> vector<6x64xf32>
    %c0_3 = arith.constant 0 : index
    %c0_4 = arith.constant 0 : index
    %3 = vector.load %arg3[%c0_3, %c0_4] : memref<64x64xf32, #tpu.memory_space<vmem>>, vector<64x64xf32>
    %cst = arith.constant dense<0.000000e+00> : vector<6x64xf32>
    %4 = tpu.matmul %2, %3, %cst {dimension_numbers = #tpu.dot_dimension_numbers<[1], [0], [0], [1], [0, 0, 1, 1], [], []>} : vector<6x64xf32>, vector<64x64xf32>, vector<6x64xf32> -> vector<6x64xf32>
    %c0_5 = arith.constant 0 : index
    %c0_6 = arith.constant 0 : index
    %5 = vector.load %arg4[%c0_5, %c0_6] : memref<1x64xf32, #tpu.memory_space<vmem>>, vector<1x64xf32>
    %6 = vector.broadcast %5 : vector<1x64xf32> to vector<6x64xf32>
    %7 = arith.addf %4, %6 : vector<6x64xf32>
    %8 = vector.extract_strided_slice %7 {offsets = [0, 0], sizes = [6, 32], strides = [1, 1]} : vector<6x64xf32> to vector<6x32xf32>
    %9 = arith.negf %8 : vector<6x32xf32>
    %10 = math.exp %9 : vector<6x32xf32>
    %cst_7 = arith.constant 1.000000e+00 : f32
    %11 = vector.broadcast %cst_7 : f32 to vector<6x32xf32>
    %12 = arith.addf %11, %10 : vector<6x32xf32>
    %13 = arith.divf %11, %12 : vector<6x32xf32>
    %14 = vector.extract_strided_slice %7 {offsets = [0, 32], sizes = [6, 32], strides = [1, 1]} : vector<6x64xf32> to vector<6x32xf32>
    %cst_8 = arith.constant 0.000000e+00 : f32
    %15 = vector.broadcast %cst_8 : f32 to vector<6x32xf32>
    %16 = arith.maximumf %14, %15 : vector<6x32xf32>
    %17 = arith.mulf %16, %13 : vector<6x32xf32>
    %cst_9 = arith.constant 1.000000e+00 : f32
    %18 = vector.broadcast %cst_9 : f32 to vector<6x32xf32>
    %19 = arith.subf %18, %13 : vector<6x32xf32>
    %20 = arith.mulf %19, %0 : vector<6x32xf32>
    %21 = arith.addf %17, %20 : vector<6x32xf32>
    %c0_10 = arith.constant 0 : index
    %c0_11 = arith.constant 0 : index
    %22 = vector.load %arg5[%c0_10, %c0_11] : memref<6x32xf32, #tpu.memory_space<vmem>>, vector<6x32xf32>
    tpu.vector_store %arg5[%c0_10, %c0_11], %21 {strides = array<i32>} : memref<6x32xf32, #tpu.memory_space<vmem>>, vector<6x32xf32>,
    return
  }
  func.func @transform_0(%arg0: i32) -> (i32, i32) {
    %c0_i32 = arith.constant 0 : i32
    %c0_i32_0 = arith.constant 0 : i32
    %c0_i32_1 = arith.constant 0 : i32
    return %c0_i32, %c0_i32_0 : i32, i32
  }
  func.func @transform_1(%arg0: i32) -> (i32, i32) {
    %c0_i32 = arith.constant 0 : i32
    %c0_i32_0 = arith.constant 0 : i32
    %c0_i32_1 = arith.constant 0 : i32
    return %c0_i32, %c0_i32_0 : i32, i32
  }
  func.func @transform_2(%arg0: i32) -> (i32, i32) {
    %c0_i32 = arith.constant 0 : i32
    %c0_i32_0 = arith.constant 0 : i32
    %c0_i32_1 = arith.constant 0 : i32
    return %c0_i32, %c0_i32_0 : i32, i32
  }
  func.func @transform_3(%arg0: i32) -> (i32, i32) {
    %c0_i32 = arith.constant 0 : i32
    %c0_i32_0 = arith.constant 0 : i32
    %c0_i32_1 = arith.constant 0 : i32
    return %c0_i32, %c0_i32_0 : i32, i32
  }
  func.func @transform_4(%arg0: i32) -> (i32, i32) {
    %c0_i32 = arith.constant 0 : i32
    %c0_i32_0 = arith.constant 0 : i32
    %c0_i32_1 = arith.constant 0 : i32
    return %c0_i32, %c0_i32_0 : i32, i32
  }
}

</mosaic_0001>

<llo_original>
// kernel: input_selection.1
$region0: #{input_selection.1}
  #allocation0 [shape = 'u32[]', space=smem, size = 0x4, offset = 0x4, fixed_abs, tag = 'smem constant byte address 0x4 - core index']
  #allocation1 [shape = 'u32[144,128]{1,0:T(1,128)}', space=vmem, size = 0x12000, scoped, tag = 'internal scratch']
  %s0 = inlined_call_operand.vmem [shape: f32[6,32], index: 0, kind: input, shape index: {}]
  %s1 = inlined_call_operand.vmem [shape: f32[6,32], index: 1, kind: input, shape index: {}]
  %s2 = inlined_call_operand.vmem [shape: f32[64,64], index: 2, kind: input, shape index: {}]
  %s3 = inlined_call_operand.vmem [shape: f32[1,64], index: 3, kind: input, shape index: {}]
  %s4 = inlined_call_operand.hbm [shape: f32[6,32], index: 4, kind: output, shape index: {}]
  %s5 = sld [smem:[#allocation0]]
  $region26: #{input_selection.1} parent=0
    _
  %s7 = ssub.s32 1, %s5
  %s8 = scalar_select 0, %s7, %s5
  $region1: #{input_selection.1} parent=0
    #allocation2 [shape = 'u8[4096]{0}', space=vmem, size = 0x1000, scoped, tag = 'output window, operand 0, single buffered']
    #allocation3 [shape = 's32[1]{0}', space=sflag, size = 0x4, scoped, tag = 'scoped memory for input_selection.1']
    %9 = vsyncpa [#allocation3], 0
    // Predicated region
    $region2: #{input_selection.1} parent=1 // pred_check
      _
    $region3: #{input_selection.1} parent=1 // pred_check_branch
      %11 = sbr.rel (0) target = $region5
    $region4: #{input_selection.1} parent=1 // pred_region
      _
    $region5: #{input_selection.1} parent=1 // pred_fallthru
      _
    // Predicated region
    $region6: #{input_selection.1} parent=1 // pred_check
      _
    $region7: #{input_selection.1} parent=1 // pred_check_branch
      %13 = sbr.rel (0) target = $region9
    $region8: #{input_selection.1} parent=1 // pred_region
      _
    $region9: #{input_selection.1} parent=1 // pred_fallthru
      _
    // Predicated region
    $region10: #{input_selection.1} parent=1 // pred_check
      _
    $region11: #{input_selection.1} parent=1 // pred_check_branch
      %15 = sbr.rel (0) target = $region13
    $region12: #{input_selection.1} parent=1 // pred_region
      _
    $region13: #{input_selection.1} parent=1 // pred_fallthru
      _
    // Predicated region
    $region14: #{input_selection.1} parent=1 // pred_check
      _
    $region15: #{input_selection.1} parent=1 // pred_check_branch
      %17 = sbr.rel (0) target = $region17
    $region16: #{input_selection.1} parent=1 // pred_region
      _
    $region17: #{input_selection.1} parent=1 // pred_fallthru
      _
    %v18 = vld [vmem:[%s0] sm:$0x3f]
    %v19 = vld [vmem:[%s1] sm:$0x3f]
    %21 = vrot.lane.b32.xlu0 %v19, 32
    %v22 = vpop.permute.xlu0 %21
    %vm24 = vcmask 261120
    %v25 = vsel %vm24, %v18, %v22
    %v26 = vld [vmem:[%s2] sm:$0xff]
    %v27 = vld [vmem:[%s2 + $0x8] sm:$0xff]
    %v28 = vld [vmem:[%s2 + $0x10] sm:$0xff]
    %v29 = vld [vmem:[%s2 + $0x18] sm:$0xff]
    %v30 = vld [vmem:[%s2 + $0x20] sm:$0xff]
    %v31 = vld [vmem:[%s2 + $0x28] sm:$0xff]
    %v32 = vld [vmem:[%s2 + $0x30] sm:$0xff]
    %v33 = vld [vmem:[%s2 + $0x38] sm:$0xff]
    %v34 = vld [vmem:[%s3] sm:$0x1]
    %v36 = vlaneseq
    %v37 = vshrl.u32 %v36, 7
    %v38 = vsub.s32 0, %v37
    %v39 = vrot.slane %v34, %v38
    %vm41 = vcmask 523264
    %v43 = vsel %vm41, %v25, 0
    %45 = vmatprep.subr.mxu0 0.0
    %46 = vmatpush1.msra.mxu0 %v26
    %47 = vmatprep.subr.mxu0 0.0
    %48 = vmatpush1.msra.mxu0 %v27
    %49 = vmatprep.subr.mxu0 0.0
    %50 = vmatpush1.msra.mxu0 %v28
    %51 = vmatprep.subr.mxu0 0.0
    %52 = vmatpush1.msra.mxu0 %v29
    %53 = vmatprep.subr.mxu0 0.0
    %54 = vmatpush1.msra.mxu0 %v30
    %55 = vmatprep.subr.mxu0 0.0
    %56 = vmatpush1.msra.mxu0 %v31
    %57 = vmatprep.subr.mxu0 0.0
    %58 = vmatpush1.msra.mxu0 %v32
    %59 = vmatprep.subr.mxu0 0.0
    %60 = vmatpush1.msra.mxu0 %v33
    %61 = vmatprep.subr.mxu0 0.0
    %62 = vmatpush1.msra.mxu0 0.0
    %63 = vmatprep.subr.mxu0 0.0
    %64 = vmatpush1.msra.mxu0 0.0
    %65 = vmatprep.subr.mxu0 0.0
    %66 = vmatpush1.msra.mxu0 0.0
    %67 = vmatprep.subr.mxu0 0.0
    %68 = vmatpush1.msra.mxu0 0.0
    %69 = vmatprep.subr.mxu0 0.0
    %70 = vmatpush1.msra.mxu0 0.0
    %71 = vmatprep.subr.mxu0 0.0
    %72 = vmatpush1.msra.mxu0 0.0
    %73 = vmatprep.subr.mxu0 0.0
    %74 = vmatpush1.msra.mxu0 0.0
    %75 = vmatprep.subr.mxu0 0.0
    %76 = vmatpush1.msra.mxu0 0.0
    %77 = vmatprep.subr.mxu0 0.0
    %78 = vmatpush1.msra.mxu0 0.0
    %79 = vmatprep.subr.mxu0 0.0
    %80 = vmatpush1.msra.mxu0 0.0
    %81 = vmatprep.subr.mxu0 0.0
    %82 = vmatpush1.msra.mxu0 0.0
    %83 = vmatprep.subr.mxu0 0.0
    %84 = vmatpush1.msra.mxu0 0.0
    %85 = vmatprep.subr.mxu0 0.0
    %86 = vmatpush1.msra.mxu0 0.0
    %87 = vmatprep.subr.mxu0 0.0
    %88 = vmatpush1.msra.mxu0 0.0
    %89 = vmatprep.subr.mxu0 0.0
    %90 = vmatpush1.msra.mxu0 0.0
    %91 = vmatprep.subr.mxu0 0.0
    %92 = vmatpush1.msra.mxu0 0.0
    %93 = vmatprep.subr.mxu0 0.0
    %94 = vmatpush1.msra.mxu0 0.0
    %95 = vmatprep.subr.mxu0 0.0
    %96 = vmatpush1.msra.mxu0 0.0
    %97 = vmatprep.subr.mxu0 0.0
    %98 = vmatpush1.msra.mxu0 0.0
    %99 = vmatprep.subr.mxu0 0.0
    %100 = vmatpush1.msra.mxu0 0.0
    %101 = vmatprep.subr.mxu0 0.0
    %102 = vmatpush1.msra.mxu0 0.0
    %103 = vmatprep.subr.mxu0 0.0
    %104 = vmatpush1.msra.mxu0 0.0
    %105 = vmatprep.subr.mxu0 0.0
    %106 = vmatpush1.msra.mxu0 0.0
    %107 = vmatprep.subr.mxu0 0.0
    %108 = vmatpush1.msra.mxu0 0.0
    %109 = vmatprep.mubr.f32.mxu0 0.0
    %110 = vmatmul.mubr.f32.gmra.mrb[0].mxu0 %v43
    %v111 = vpop.f32.mrb[0].mxu0
    %v112 = vadd.f32 %v39, %v111
    %v113 = vpop.f32.mrb[0].mxu0
    %114 = vdwg.mxu0
    %v115 = vxor.u32 %v112, 2147483648
    %v116 = vmul.f32 %v115, 1.442695
    %v117 = vpow.pop %v116
    %v118 = vadd.f32 %v117, 1.0
    %v119 = vrcp.pop %v118
    %v120 = vmul.f32 1.0, %v119
    %v121 = vmax.f32 %v112, 0.0
    %123 = vrot.lane.b32.xlu0 %v120, 32
    %v124 = vpop.permute.xlu0 %123
    %v126 = vmul.f32 %v121, %v124
    %v127 = vsub.f32 1.0, %v120
    %v128 = vmul.f32 %v127, %v18
    %130 = vrot.lane.b32.xlu0 %v128, 32
    %v131 = vpop.permute.xlu0 %130
    %v133 = vadd.f32 %v126, %v131
    %135 = vrot.lane.b32.xlu0 %v133, 96
    %v136 = vpop.permute.xlu0 %135
    %vm138 = vcmask 259072
    %139 = vst.msk [vmem:[#allocation2] sm:$0x3f] %vm138, %v136
    // Predicated region
    $region18: #{input_selection.1} parent=1 // pred_check
      _
    $region19: #{input_selection.1} parent=1 // pred_check_branch
      %141 = sbr.rel (0) target = $region21
    $region20: #{input_selection.1} parent=1 // pred_region
      %s143 = ssub.s32 128, 128
      %144 = vsyncadd [#allocation3], %s143
      %s146 = sshll.u32 [#allocation2], 4
      %s147 = int_to_ptr.vmem [resolvable:$true] %s146
      %149 = dma.vmem_to_hbm [thread:$0]  %s147, 128, %s4, [#allocation3]
    $region21: #{input_selection.1} parent=1 // pred_fallthru
      _
    // Predicated region
    $region22: #{input_selection.1} parent=1 // pred_check
      _
    $region23: #{input_selection.1} parent=1 // pred_check_branch
      %151 = sbr.rel (0) target = $region25
    $region24: #{input_selection.1} parent=1 // pred_region
      %152 = dma.done [#allocation3], 128
    $region25: #{input_selection.1} parent=1 // pred_fallthru
      _
    %153 = vsyncpa [#allocation3], 1

</llo_original>
